<compile_context>
chip_gen: v5e
topology: v5e:2x2
jax: 0.10.0
libtpu: 0.0.40
codegen_flags: <defaults>
</compile_context>

<pallas_src>
import functools

import jax
import jax.numpy as jnp
from jax.experimental import pallas as pl
from jax.experimental.pallas import tpu as pltpu

# t * t2 * t3 = 1000 * 100 * 1000  (positive -> safe to fold through the ReLU)
SCALE = 1000.0 * 100.0 * 1000.0


def _small_kernel(x_ref, w_ref, b_ref, o_ref, *, n_batch, cout):
    # x_ref: (N, H, W) f32 VMEM; w_ref/b_ref: (Cout,) f32 SMEM; o_ref: (N, Cout, H, W) VMEM.
    for n in range(n_batch):          # static unroll (tiny)
        x = x_ref[n]
        for c in range(cout):         # static unroll (7): fma + relu + store per channel
            o_ref[n, c] = jnp.maximum(x * w_ref[c] + b_ref[c], 0.0)


def _tiled_kernel(x_ref, w_ref, b_ref, o_ref, *, cout):
    # x_ref: (tr, tw) f32 VMEM; w_ref/b_ref: (Cout,) f32 SMEM; o_ref: (Cout, tr, tw) VMEM.
    x = x_ref[...]
    for c in range(cout):             # static unroll: 7 fma + 7 max + 7 lane-dense stores
        o_ref[c] = jnp.maximum(x * w_ref[c] + b_ref[c], 0.0)


def conv1x1_scale_relu(x_nchw, weight, bias, *,
                       block_rows=1024, block_lanes=256,
                       small_path_max_elems=128 * 1024):
    """x_nchw: (N, 1, H, W) f32; weight: (Cout, 1[,1,1]) f32; bias: (Cout,) f32."""
    N, Cin, H, W = x_nchw.shape
    assert Cin == 1, "kernel specialized for Conv2d(1, Cout, 1)"
    Cout = int(bias.shape[0])

    # Fold the (positive) scale into the tiny per-channel weight / bias.
    w_vec = jnp.reshape(weight, (Cout,)).astype(jnp.float32) * SCALE
    b_vec = jnp.reshape(bias, (Cout,)).astype(jnp.float32) * SCALE

    M = N * H * W

    if M <= small_path_max_elems:
        # ---- single-block fast path: everything lives in VMEM for a single grid step ----
        x_nhw = x_nchw.reshape(N, H, W)                   # free (Cin == 1)
        return pl.pallas_call(
            functools.partial(_small_kernel, n_batch=N, cout=Cout),
            out_shape=jax.ShapeDtypeStruct((N, Cout, H, W), jnp.float32),
            grid_spec=pl.GridSpec(
                grid=(1,),
                in_specs=[
                    pl.BlockSpec((N, H, W), lambda i: (0, 0, 0)),
                    pl.BlockSpec(memory_space=pltpu.MemorySpace.SMEM),
                    pl.BlockSpec(memory_space=pltpu.MemorySpace.SMEM),
                ],
                out_specs=pl.BlockSpec((N, Cout, H, W), lambda i: (0, 0, 0, 0)),
            ),
        )(x_nhw, w_vec, b_vec)

    # ---- tiled path for large spatial extents (HBM-write-bound) ----
    NH = N * H
    x_2d = x_nchw.reshape(NH, W)                          # free (Cin == 1)

    # Row (sublane) tile: multiple of 8, or the full dim (legal via the full-dim exception).
    if NH <= block_rows:
        tr = NH
    else:
        tr = max(8, (block_rows // 8) * 8)
    # Lane tile: multiple of 128, or the full dim.
    if W <= block_lanes:
        tw = W
    else:
        tw = max(128, (block_lanes // 128) * 128)

    grid = (pl.cdiv(NH, tr), pl.cdiv(W, tw))   # ragged last blocks are masked by Pallas

    out = pl.pallas_call(
        functools.partial(_tiled_kernel, cout=Cout),
        out_shape=jax.ShapeDtypeStruct((Cout, NH, W), jnp.float32),
        grid_spec=pl.GridSpec(
            grid=grid,
            in_specs=[
                pl.BlockSpec((tr, tw), lambda i, j: (i, j)),
                pl.BlockSpec(memory_space=pltpu.MemorySpace.SMEM),
                pl.BlockSpec(memory_space=pltpu.MemorySpace.SMEM),
            ],
            out_specs=pl.BlockSpec((Cout, tr, tw), lambda i, j: (0, i, j)),
        ),
        compiler_params=pltpu.CompilerParams(
            dimension_semantics=("parallel", "parallel"),
            vmem_limit_bytes=32 * 1024 * 1024,
        ),
    )(x_2d, w_vec, b_vec)

    # (Cout, N*H, W) -> (N, Cout, H, W): a free relabel for N == 1 (the module's case).
    # TODO(synk): for N > 1 this transpose is a real HBM pass; restructure the output to a
    # (N, Cout, H, W) layout with a batch grid axis if batched inputs ever matter.
    return jnp.transpose(out.reshape(Cout, N, H, W), (1, 0, 2, 3))


if __name__ == "__main__":
    key = jax.random.PRNGKey(0)
    k_x1, k_x2, k_x3, k_w, k_b = jax.random.split(key, 5)

    Cout = 7
    # Conv2d(1, 7, 1) parameters, shaped like the PyTorch module's (weight (7,1,1,1)).
    weight = jax.random.normal(k_w, (Cout, 1, 1, 1), dtype=jnp.float32) * 0.5
    bias = jax.random.normal(k_b, (Cout,), dtype=jnp.float32) * 0.1

    def ref(x):
        # Module semantics: conv(1x1, Cin=1) -> *1000 -> *100 -> *1000 -> relu.
        w = jnp.reshape(weight, (1, Cout, 1, 1))
        b = jnp.reshape(bias, (1, Cout, 1, 1))
        return jnp.maximum((x * w + b) * SCALE, 0.0)

    # 1) Small-M single-block fast path (tiny spatial size).
    x_small = jax.random.normal(k_x1, (1, 1, 60, 60), dtype=jnp.float32)
    out_small = jax.block_until_ready(conv1x1_scale_relu(x_small, weight, bias))
    assert out_small.shape == (1, Cout, 60, 60)
    assert jnp.allclose(out_small, ref(x_small), rtol=1e-5, atol=100.0)

    # 2) Small path with a batch dim (output written directly in NCHW, no transpose).
    x_batch = jax.random.normal(k_x2, (2, 1, 24, 24), dtype=jnp.float32)
    out_batch = jax.block_until_ready(conv1x1_scale_relu(x_batch, weight, bias))
    assert out_batch.shape == (2, Cout, 24, 24)
    assert jnp.allclose(out_batch, ref(x_batch), rtol=1e-5, atol=100.0)

    # 3) Tiled path (forced), exercising the 2-D grid and a ragged row block (60 % 32 != 0).
    x_tiled = jax.random.normal(k_x3, (1, 1, 60, 256), dtype=jnp.float32)
    out_tiled = jax.block_until_ready(
        conv1x1_scale_relu(x_tiled, weight, bias,
                           block_rows=32, block_lanes=256,
                           small_path_max_elems=0))
    assert out_tiled.shape == (1, Cout, 60, 256)
    assert jnp.allclose(out_tiled, ref(x_tiled), rtol=1e-5, atol=100.0)

    print("KERNEL_OK")
</pallas_src>

<mosaic_0001>
module attributes {stable_mosaic.version = 11 : i64} {
  func.func @_small_kernel(%arg0: i32, %arg1: memref<1x60x60xf32, #tpu.memory_space<vmem>>, %arg2: memref<7xf32, #tpu.memory_space<smem>>, %arg3: memref<7xf32, #tpu.memory_space<smem>>, %arg4: memref<1x7x60x60xf32, #tpu.memory_space<vmem>>) attributes {dimension_semantics = [#tpu.dimension_semantics<arbitrary>], iteration_bounds = array<i64: 1>, scalar_prefetch = 0 : i64, scratch_operands = 0 : i64, tpu.core_type = #tpu.core_type<tc>, window_params = [{pipeline_mode = #tpu.pipeline_mode<synchronous>, transform_indices = @transform_0, window_bounds = array<i64: 1, 60, 60>}, {transform_indices = @transform_1, window_bounds = array<i64: 7>}, {transform_indices = @transform_2, window_bounds = array<i64: 7>}, {pipeline_mode = #tpu.pipeline_mode<synchronous>, transform_indices = @transform_3, window_bounds = array<i64: 1, 7, 60, 60>}]} {
    %c0 = arith.constant 0 : index
    %c0_0 = arith.constant 0 : index
    %c0_1 = arith.constant 0 : index
    %0 = vector.load %arg1[%c0, %c0_0, %c0_1] : memref<1x60x60xf32, #tpu.memory_space<vmem>>, vector<1x60x60xf32>
    %1 = vector.shape_cast %0 : vector<1x60x60xf32> to vector<60x60xf32>
    %c0_2 = arith.constant 0 : index
    %2 = memref.load %arg2[%c0_2] : memref<7xf32, #tpu.memory_space<smem>>
    %3 = vector.broadcast %2 : f32 to vector<60x60xf32>
    %4 = arith.mulf %1, %3 : vector<60x60xf32>
    %c0_3 = arith.constant 0 : index
    %5 = memref.load %arg3[%c0_3] : memref<7xf32, #tpu.memory_space<smem>>
    %6 = vector.broadcast %5 : f32 to vector<60x60xf32>
    %7 = arith.addf %4, %6 : vector<60x60xf32>
    %cst = arith.constant 0.000000e+00 : f32
    %8 = vector.broadcast %cst : f32 to vector<60x60xf32>
    %9 = arith.maximumf %7, %8 : vector<60x60xf32>
    %c0_4 = arith.constant 0 : index
    %c0_5 = arith.constant 0 : index
    %c0_6 = arith.constant 0 : index
    %c0_7 = arith.constant 0 : index
    %10 = vector.load %arg4[%c0_4, %c0_5, %c0_6, %c0_7] : memref<1x7x60x60xf32, #tpu.memory_space<vmem>>, vector<1x1x60x60xf32>
    %11 = vector.shape_cast %10 : vector<1x1x60x60xf32> to vector<60x60xf32>
    %12 = vector.shape_cast %9 : vector<60x60xf32> to vector<1x1x60x60xf32>
    tpu.vector_store %arg4[%c0_4, %c0_5, %c0_6, %c0_7], %12 {strides = array<i32>} : memref<1x7x60x60xf32, #tpu.memory_space<vmem>>, vector<1x1x60x60xf32>,
    %c1 = arith.constant 1 : index
    %13 = memref.load %arg2[%c1] : memref<7xf32, #tpu.memory_space<smem>>
    %14 = vector.broadcast %13 : f32 to vector<60x60xf32>
    %15 = arith.mulf %1, %14 : vector<60x60xf32>
    %c1_8 = arith.constant 1 : index
    %16 = memref.load %arg3[%c1_8] : memref<7xf32, #tpu.memory_space<smem>>
    %17 = vector.broadcast %16 : f32 to vector<60x60xf32>
    %18 = arith.addf %15, %17 : vector<60x60xf32>
    %cst_9 = arith.constant 0.000000e+00 : f32
    %19 = vector.broadcast %cst_9 : f32 to vector<60x60xf32>
    %20 = arith.maximumf %18, %19 : vector<60x60xf32>
    %c0_10 = arith.constant 0 : index
    %c1_11 = arith.constant 1 : index
    %c0_12 = arith.constant 0 : index
    %c0_13 = arith.constant 0 : index
    %21 = vector.load %arg4[%c0_10, %c1_11, %c0_12, %c0_13] : memref<1x7x60x60xf32, #tpu.memory_space<vmem>>, vector<1x1x60x60xf32>
    %22 = vector.shape_cast %21 : vector<1x1x60x60xf32> to vector<60x60xf32>
    %23 = vector.shape_cast %20 : vector<60x60xf32> to vector<1x1x60x60xf32>
    tpu.vector_store %arg4[%c0_10, %c1_11, %c0_12, %c0_13], %23 {strides = array<i32>} : memref<1x7x60x60xf32, #tpu.memory_space<vmem>>, vector<1x1x60x60xf32>,
    %c2 = arith.constant 2 : index
    %24 = memref.load %arg2[%c2] : memref<7xf32, #tpu.memory_space<smem>>
    %25 = vector.broadcast %24 : f32 to vector<60x60xf32>
    %26 = arith.mulf %1, %25 : vector<60x60xf32>
    %c2_14 = arith.constant 2 : index
    %27 = memref.load %arg3[%c2_14] : memref<7xf32, #tpu.memory_space<smem>>
    %28 = vector.broadcast %27 : f32 to vector<60x60xf32>
    %29 = arith.addf %26, %28 : vector<60x60xf32>
    %cst_15 = arith.constant 0.000000e+00 : f32
    %30 = vector.broadcast %cst_15 : f32 to vector<60x60xf32>
    %31 = arith.maximumf %29, %30 : vector<60x60xf32>
    %c0_16 = arith.constant 0 : index
    %c2_17 = arith.constant 2 : index
    %c0_18 = arith.constant 0 : index
    %c0_19 = arith.constant 0 : index
    %32 = vector.load %arg4[%c0_16, %c2_17, %c0_18, %c0_19] : memref<1x7x60x60xf32, #tpu.memory_space<vmem>>, vector<1x1x60x60xf32>
    %33 = vector.shape_cast %32 : vector<1x1x60x60xf32> to vector<60x60xf32>
    %34 = vector.shape_cast %31 : vector<60x60xf32> to vector<1x1x60x60xf32>
    tpu.vector_store %arg4[%c0_16, %c2_17, %c0_18, %c0_19], %34 {strides = array<i32>} : memref<1x7x60x60xf32, #tpu.memory_space<vmem>>, vector<1x1x60x60xf32>,
    %c3 = arith.constant 3 : index
    %35 = memref.load %arg2[%c3] : memref<7xf32, #tpu.memory_space<smem>>
    %36 = vector.broadcast %35 : f32 to vector<60x60xf32>
    %37 = arith.mulf %1, %36 : vector<60x60xf32>
    %c3_20 = arith.constant 3 : index
    %38 = memref.load %arg3[%c3_20] : memref<7xf32, #tpu.memory_space<smem>>
    %39 = vector.broadcast %38 : f32 to vector<60x60xf32>
    %40 = arith.addf %37, %39 : vector<60x60xf32>
    %cst_21 = arith.constant 0.000000e+00 : f32
    %41 = vector.broadcast %cst_21 : f32 to vector<60x60xf32>
    %42 = arith.maximumf %40, %41 : vector<60x60xf32>
    %c0_22 = arith.constant 0 : index
    %c3_23 = arith.constant 3 : index
    %c0_24 = arith.constant 0 : index
    %c0_25 = arith.constant 0 : index
    %43 = vector.load %arg4[%c0_22, %c3_23, %c0_24, %c0_25] : memref<1x7x60x60xf32, #tpu.memory_space<vmem>>, vector<1x1x60x60xf32>
    %44 = vector.shape_cast %43 : vector<1x1x60x60xf32> to vector<60x60xf32>
    %45 = vector.shape_cast %42 : vector<60x60xf32> to vector<1x1x60x60xf32>
    tpu.vector_store %arg4[%c0_22, %c3_23, %c0_24, %c0_25], %45 {strides = array<i32>} : memref<1x7x60x60xf32, #tpu.memory_space<vmem>>, vector<1x1x60x60xf32>,
    %c4 = arith.constant 4 : index
    %46 = memref.load %arg2[%c4] : memref<7xf32, #tpu.memory_space<smem>>
    %47 = vector.broadcast %46 : f32 to vector<60x60xf32>
    %48 = arith.mulf %1, %47 : vector<60x60xf32>
    %c4_26 = arith.constant 4 : index
    %49 = memref.load %arg3[%c4_26] : memref<7xf32, #tpu.memory_space<smem>>
    %50 = vector.broadcast %49 : f32 to vector<60x60xf32>
    %51 = arith.addf %48, %50 : vector<60x60xf32>
    %cst_27 = arith.constant 0.000000e+00 : f32
    %52 = vector.broadcast %cst_27 : f32 to vector<60x60xf32>
    %53 = arith.maximumf %51, %52 : vector<60x60xf32>
    %c0_28 = arith.constant 0 : index
    %c4_29 = arith.constant 4 : index
    %c0_30 = arith.constant 0 : index
    %c0_31 = arith.constant 0 : index
    %54 = vector.load %arg4[%c0_28, %c4_29, %c0_30, %c0_31] : memref<1x7x60x60xf32, #tpu.memory_space<vmem>>, vector<1x1x60x60xf32>
    %55 = vector.shape_cast %54 : vector<1x1x60x60xf32> to vector<60x60xf32>
    %56 = vector.shape_cast %53 : vector<60x60xf32> to vector<1x1x60x60xf32>
    tpu.vector_store %arg4[%c0_28, %c4_29, %c0_30, %c0_31], %56 {strides = array<i32>} : memref<1x7x60x60xf32, #tpu.memory_space<vmem>>, vector<1x1x60x60xf32>,
    %c5 = arith.constant 5 : index
    %57 = memref.load %arg2[%c5] : memref<7xf32, #tpu.memory_space<smem>>
    %58 = vector.broadcast %57 : f32 to vector<60x60xf32>
    %59 = arith.mulf %1, %58 : vector<60x60xf32>
    %c5_32 = arith.constant 5 : index
    %60 = memref.load %arg3[%c5_32] : memref<7xf32, #tpu.memory_space<smem>>
    %61 = vector.broadcast %60 : f32 to vector<60x60xf32>
    %62 = arith.addf %59, %61 : vector<60x60xf32>
    %cst_33 = arith.constant 0.000000e+00 : f32
    %63 = vector.broadcast %cst_33 : f32 to vector<60x60xf32>
    %64 = arith.maximumf %62, %63 : vector<60x60xf32>
    %c0_34 = arith.constant 0 : index
    %c5_35 = arith.constant 5 : index
    %c0_36 = arith.constant 0 : index
    %c0_37 = arith.constant 0 : index
    %65 = vector.load %arg4[%c0_34, %c5_35, %c0_36, %c0_37] : memref<1x7x60x60xf32, #tpu.memory_space<vmem>>, vector<1x1x60x60xf32>
    %66 = vector.shape_cast %65 : vector<1x1x60x60xf32> to vector<60x60xf32>
    %67 = vector.shape_cast %64 : vector<60x60xf32> to vector<1x1x60x60xf32>
    tpu.vector_store %arg4[%c0_34, %c5_35, %c0_36, %c0_37], %67 {strides = array<i32>} : memref<1x7x60x60xf32, #tpu.memory_space<vmem>>, vector<1x1x60x60xf32>,
    %c6 = arith.constant 6 : index
    %68 = memref.load %arg2[%c6] : memref<7xf32, #tpu.memory_space<smem>>
    %69 = vector.broadcast %68 : f32 to vector<60x60xf32>
    %70 = arith.mulf %1, %69 : vector<60x60xf32>
    %c6_38 = arith.constant 6 : index
    %71 = memref.load %arg3[%c6_38] : memref<7xf32, #tpu.memory_space<smem>>
    %72 = vector.broadcast %71 : f32 to vector<60x60xf32>
    %73 = arith.addf %70, %72 : vector<60x60xf32>
    %cst_39 = arith.constant 0.000000e+00 : f32
    %74 = vector.broadcast %cst_39 : f32 to vector<60x60xf32>
    %75 = arith.maximumf %73, %74 : vector<60x60xf32>
    %c0_40 = arith.constant 0 : index
    %c6_41 = arith.constant 6 : index
    %c0_42 = arith.constant 0 : index
    %c0_43 = arith.constant 0 : index
    %76 = vector.load %arg4[%c0_40, %c6_41, %c0_42, %c0_43] : memref<1x7x60x60xf32, #tpu.memory_space<vmem>>, vector<1x1x60x60xf32>
    %77 = vector.shape_cast %76 : vector<1x1x60x60xf32> to vector<60x60xf32>
    %78 = vector.shape_cast %75 : vector<60x60xf32> to vector<1x1x60x60xf32>
    tpu.vector_store %arg4[%c0_40, %c6_41, %c0_42, %c0_43], %78 {strides = array<i32>} : memref<1x7x60x60xf32, #tpu.memory_space<vmem>>, vector<1x1x60x60xf32>,
    return
  }
  func.func @transform_0(%arg0: i32) -> (i32, i32, i32) {
    %c0_i32 = arith.constant 0 : i32
    %c0_i32_0 = arith.constant 0 : i32
    %c0_i32_1 = arith.constant 0 : i32
    %c0_i32_2 = arith.constant 0 : i32
    return %c0_i32, %c0_i32_0, %c0_i32_1 : i32, i32, i32
  }
  func.func @transform_1(%arg0: i32) -> i32 {
    %c0_i32 = arith.constant 0 : i32
    %c0_i32_0 = arith.constant 0 : i32
    return %c0_i32 : i32
  }
  func.func @transform_2(%arg0: i32) -> i32 {
    %c0_i32 = arith.constant 0 : i32
    %c0_i32_0 = arith.constant 0 : i32
    return %c0_i32 : i32
  }
  func.func @transform_3(%arg0: i32) -> (i32, i32, i32, i32) {
    %c0_i32 = arith.constant 0 : i32
    %c0_i32_0 = arith.constant 0 : i32
    %c0_i32_1 = arith.constant 0 : i32
    %c0_i32_2 = arith.constant 0 : i32
    %c0_i32_3 = arith.constant 0 : i32
    return %c0_i32, %c0_i32_0, %c0_i32_1, %c0_i32_2 : i32, i32, i32, i32
  }
}

</mosaic_0001>

<llo_original>
// kernel: tpu_custom_call.1
$region0: #{tpu_custom_call.1}
  #allocation0 [shape = 'u32[]', space=smem, size = 0x4, offset = 0x4, fixed_abs, tag = 'smem constant byte address 0x4 - core index']
  #allocation1 [shape = 'u32[72,128]{1,0:T(1,128)}', space=vmem, size = 0x9000, scoped, tag = 'internal scratch']
  %s0 = inlined_call_operand.vmem [shape: f32[1,60,60], index: 0, kind: input, shape index: {}]
  %s1 = inlined_call_operand.vmem [shape: f32[7], index: 1, kind: input, shape index: {}]
  %s2 = inlined_call_operand.vmem [shape: f32[7], index: 2, kind: input, shape index: {}]
  %s3 = inlined_call_operand.vmem [shape: f32[1,7,60,60], index: 3, kind: output, shape index: {}]
  %s4 = sld [smem:[#allocation0]]
  $region30: #{tpu_custom_call.1} parent=0
    _
  %s6 = ssub.s32 1, %s4
  %s7 = scalar_select 0, %s6, %s4
  $region1: #{tpu_custom_call.1} parent=0
    #allocation2 [shape = 'u8[512]{0}', space=smem, size = 0x200, scoped, tag = 'input window, operand 1, single buffered']
    #allocation3 [shape = 's32[1]{0}', space=sflag, size = 0x4, scoped, tag = 'scoped memory for tpu_custom_call.1']
    #allocation4 [shape = 'u8[512]{0}', space=smem, size = 0x200, scoped, tag = 'input window, operand 2, single buffered']
    #allocation5 [shape = 's32[1]{0}', space=sflag, size = 0x4, scoped, tag = 'scoped memory for tpu_custom_call.1']
    %8 = vsyncpa [#allocation3], 0
    %9 = vsyncpa [#allocation5], 0
    // Predicated region
    $region2: #{tpu_custom_call.1} parent=1 // pred_check
      _
    $region3: #{tpu_custom_call.1} parent=1 // pred_check_branch
      %11 = sbr.rel (0) target = $region5
    $region4: #{tpu_custom_call.1} parent=1 // pred_region
      _
    $region5: #{tpu_custom_call.1} parent=1 // pred_fallthru
      _
    // Predicated region
    $region6: #{tpu_custom_call.1} parent=1 // pred_check
      _
    $region7: #{tpu_custom_call.1} parent=1 // pred_check_branch
      %13 = sbr.rel (0) target = $region9
    $region8: #{tpu_custom_call.1} parent=1 // pred_region
      %15 = vsyncadd [#allocation3], 0
      %s17 = sshll.u32 %s1, 4
      %s18 = int_to_ptr.vmem [resolvable:$true] %s17
      %20 = dma.vmem_to_smem %s18, 16, [#allocation2], [#allocation3]
    $region9: #{tpu_custom_call.1} parent=1 // pred_fallthru
      _
    // Predicated region
    $region10: #{tpu_custom_call.1} parent=1 // pred_check
      _
    $region11: #{tpu_custom_call.1} parent=1 // pred_check_branch
      %22 = sbr.rel (0) target = $region13
    $region12: #{tpu_custom_call.1} parent=1 // pred_region
      %24 = vsyncadd [#allocation5], 0
      %s26 = sshll.u32 %s2, 4
      %s27 = int_to_ptr.vmem [resolvable:$true] %s26
      %29 = dma.vmem_to_smem %s27, 16, [#allocation4], [#allocation5]
    $region13: #{tpu_custom_call.1} parent=1 // pred_fallthru
      _
    // Predicated region
    $region14: #{tpu_custom_call.1} parent=1 // pred_check
      _
    $region15: #{tpu_custom_call.1} parent=1 // pred_check_branch
      %31 = sbr.rel (0) target = $region17
    $region16: #{tpu_custom_call.1} parent=1 // pred_region
      %33 = dma.done [#allocation3], 16
    $region17: #{tpu_custom_call.1} parent=1 // pred_fallthru
      _
    // Predicated region
    $region18: #{tpu_custom_call.1} parent=1 // pred_check
      _
    $region19: #{tpu_custom_call.1} parent=1 // pred_check_branch
      %35 = sbr.rel (0) target = $region21
    $region20: #{tpu_custom_call.1} parent=1 // pred_region
      %37 = dma.done [#allocation5], 16
    $region21: #{tpu_custom_call.1} parent=1 // pred_fallthru
      _
    %38 = sfence
    %v39 = vld [vmem:[%s0] sm:$0xff]
    %v40 = vld [vmem:[%s0 + $0x8] sm:$0xff]
    %v41 = vld [vmem:[%s0 + $0x10] sm:$0xff]
    %v42 = vld [vmem:[%s0 + $0x18] sm:$0xff]
    %v43 = vld [vmem:[%s0 + $0x20] sm:$0xff]
    %v44 = vld [vmem:[%s0 + $0x28] sm:$0xff]
    %v45 = vld [vmem:[%s0 + $0x30] sm:$0xff]
    %v46 = vld [vmem:[%s0 + $0x38] sm:$0xf]
    %s47 = sld [smem:[#allocation2]]
    %v48 = vstv %s47
    %v49 = vmul.f32 %v39, %v48
    %v50 = vmul.f32 %v40, %v48
    %v51 = vmul.f32 %v41, %v48
    %v52 = vmul.f32 %v42, %v48
    %v53 = vmul.f32 %v43, %v48
    %v54 = vmul.f32 %v44, %v48
    %v55 = vmul.f32 %v45, %v48
    %v56 = vmul.f32 %v46, %v48
    %s57 = sld [smem:[#allocation4]]
    %v58 = vstv %s57
    %v59 = vadd.f32 %v49, %v58
    %v60 = vadd.f32 %v50, %v58
    %v61 = vadd.f32 %v51, %v58
    %v62 = vadd.f32 %v52, %v58
    %v63 = vadd.f32 %v53, %v58
    %v64 = vadd.f32 %v54, %v58
    %v65 = vadd.f32 %v55, %v58
    %v66 = vadd.f32 %v56, %v58
    %v67 = vmax.f32 %v59, 0.0
    %v68 = vmax.f32 %v60, 0.0
    %v69 = vmax.f32 %v61, 0.0
    %v70 = vmax.f32 %v62, 0.0
    %v71 = vmax.f32 %v63, 0.0
    %v72 = vmax.f32 %v64, 0.0
    %v73 = vmax.f32 %v65, 0.0
    %v74 = vmax.f32 %v66, 0.0
    %vm75 = vcmask 490496
    %76 = vst.msk [vmem:[%s3] sm:$0xff] %vm75, %v67
    %77 = vst.msk [vmem:[%s3 + $0x8] sm:$0xff] %vm75, %v68
    %78 = vst.msk [vmem:[%s3 + $0x10] sm:$0xff] %vm75, %v69
    %79 = vst.msk [vmem:[%s3 + $0x18] sm:$0xff] %vm75, %v70
    %80 = vst.msk [vmem:[%s3 + $0x20] sm:$0xff] %vm75, %v71
    %81 = vst.msk [vmem:[%s3 + $0x28] sm:$0xff] %vm75, %v72
    %82 = vst.msk [vmem:[%s3 + $0x30] sm:$0xff] %vm75, %v73
    %vm83 = vcmask 486400
    %84 = vst.msk [vmem:[%s3 + $0x38] sm:$0xf] %vm83, %v74
    %s85 = sld [smem:[#allocation2 + $0x1]]
    %v86 = vstv %s85
    %v87 = vmul.f32 %v39, %v86
    %v88 = vmul.f32 %v40, %v86
    %v89 = vmul.f32 %v41, %v86
    %v90 = vmul.f32 %v42, %v86
    %v91 = vmul.f32 %v43, %v86
    %v92 = vmul.f32 %v44, %v86
    %v93 = vmul.f32 %v45, %v86
    %v94 = vmul.f32 %v46, %v86
    %s95 = sld [smem:[#allocation4 + $0x1]]
    %v96 = vstv %s95
    %v97 = vadd.f32 %v87, %v96
    %v98 = vadd.f32 %v88, %v96
    %v99 = vadd.f32 %v89, %v96
    %v100 = vadd.f32 %v90, %v96
    %v101 = vadd.f32 %v91, %v96
    %v102 = vadd.f32 %v92, %v96
    %v103 = vadd.f32 %v93, %v96
    %v104 = vadd.f32 %v94, %v96
    %v105 = vmax.f32 %v97, 0.0
    %v106 = vmax.f32 %v98, 0.0
    %v107 = vmax.f32 %v99, 0.0
    %v108 = vmax.f32 %v100, 0.0
    %v109 = vmax.f32 %v101, 0.0
    %v110 = vmax.f32 %v102, 0.0
    %v111 = vmax.f32 %v103, 0.0
    %v112 = vmax.f32 %v104, 0.0
    %s113 = scalar_lea.vmem %s3, 64
    %114 = vst.msk [vmem:[%s113] sm:$0xff] %vm75, %v105
    %115 = vst.msk [vmem:[%s113 + $0x8] sm:$0xff] %vm75, %v106
    %116 = vst.msk [vmem:[%s113 + $0x10] sm:$0xff] %vm75, %v107
    %117 = vst.msk [vmem:[%s113 + $0x18] sm:$0xff] %vm75, %v108
    %118 = vst.msk [vmem:[%s113 + $0x20] sm:$0xff] %vm75, %v109
    %119 = vst.msk [vmem:[%s113 + $0x28] sm:$0xff] %vm75, %v110
    %120 = vst.msk [vmem:[%s113 + $0x30] sm:$0xff] %vm75, %v111
    %121 = vst.msk [vmem:[%s113 + $0x38] sm:$0xf] %vm83, %v112
    %s122 = sld [smem:[#allocation2 + $0x2]]
    %v123 = vstv %s122
    %v124 = vmul.f32 %v39, %v123
    %v125 = vmul.f32 %v40, %v123
    %v126 = vmul.f32 %v41, %v123
    %v127 = vmul.f32 %v42, %v123
    %v128 = vmul.f32 %v43, %v123
    %v129 = vmul.f32 %v44, %v123
    %v130 = vmul.f32 %v45, %v123
    %v131 = vmul.f32 %v46, %v123
    %s132 = sld [smem:[#allocation4 + $0x2]]
    %v133 = vstv %s132
    %v134 = vadd.f32 %v124, %v133
    %v135 = vadd.f32 %v125, %v133
    %v136 = vadd.f32 %v126, %v133
    %v137 = vadd.f32 %v127, %v133
    %v138 = vadd.f32 %v128, %v133
    %v139 = vadd.f32 %v129, %v133
    %v140 = vadd.f32 %v130, %v133
    %v141 = vadd.f32 %v131, %v133
    %v142 = vmax.f32 %v134, 0.0
    %v143 = vmax.f32 %v135, 0.0
    %v144 = vmax.f32 %v136, 0.0
    %v145 = vmax.f32 %v137, 0.0
    %v146 = vmax.f32 %v138, 0.0
    %v147 = vmax.f32 %v139, 0.0
    %v148 = vmax.f32 %v140, 0.0
    %v149 = vmax.f32 %v141, 0.0
    %s150 = scalar_lea.vmem %s3, 128
    %151 = vst.msk [vmem:[%s150] sm:$0xff] %vm75, %v142
    %152 = vst.msk [vmem:[%s150 + $0x8] sm:$0xff] %vm75, %v143
    %153 = vst.msk [vmem:[%s150 + $0x10] sm:$0xff] %vm75, %v144
    %154 = vst.msk [vmem:[%s150 + $0x18] sm:$0xff] %vm75, %v145
    %155 = vst.msk [vmem:[%s150 + $0x20] sm:$0xff] %vm75, %v146
    %156 = vst.msk [vmem:[%s150 + $0x28] sm:$0xff] %vm75, %v147
    %157 = vst.msk [vmem:[%s150 + $0x30] sm:$0xff] %vm75, %v148
    %158 = vst.msk [vmem:[%s150 + $0x38] sm:$0xf] %vm83, %v149
    %s159 = sld [smem:[#allocation2 + $0x3]]
    %v160 = vstv %s159
    %v161 = vmul.f32 %v39, %v160
    %v162 = vmul.f32 %v40, %v160
    %v163 = vmul.f32 %v41, %v160
    %v164 = vmul.f32 %v42, %v160
    %v165 = vmul.f32 %v43, %v160
    %v166 = vmul.f32 %v44, %v160
    %v167 = vmul.f32 %v45, %v160
    %v168 = vmul.f32 %v46, %v160
    %s169 = sld [smem:[#allocation4 + $0x3]]
    %v170 = vstv %s169
    %v171 = vadd.f32 %v161, %v170
    %v172 = vadd.f32 %v162, %v170
    %v173 = vadd.f32 %v163, %v170
    %v174 = vadd.f32 %v164, %v170
    %v175 = vadd.f32 %v165, %v170
    %v176 = vadd.f32 %v166, %v170
    %v177 = vadd.f32 %v167, %v170
    %v178 = vadd.f32 %v168, %v170
    %v179 = vmax.f32 %v171, 0.0
    %v180 = vmax.f32 %v172, 0.0
    %v181 = vmax.f32 %v173, 0.0
    %v182 = vmax.f32 %v174, 0.0
    %v183 = vmax.f32 %v175, 0.0
    %v184 = vmax.f32 %v176, 0.0
    %v185 = vmax.f32 %v177, 0.0
    %v186 = vmax.f32 %v178, 0.0
    %s187 = scalar_lea.vmem %s3, 192
    %188 = vst.msk [vmem:[%s187] sm:$0xff] %vm75, %v179
    %189 = vst.msk [vmem:[%s187 + $0x8] sm:$0xff] %vm75, %v180
    %190 = vst.msk [vmem:[%s187 + $0x10] sm:$0xff] %vm75, %v181
    %191 = vst.msk [vmem:[%s187 + $0x18] sm:$0xff] %vm75, %v182
    %192 = vst.msk [vmem:[%s187 + $0x20] sm:$0xff] %vm75, %v183
    %193 = vst.msk [vmem:[%s187 + $0x28] sm:$0xff] %vm75, %v184
    %194 = vst.msk [vmem:[%s187 + $0x30] sm:$0xff] %vm75, %v185
    %195 = vst.msk [vmem:[%s187 + $0x38] sm:$0xf] %vm83, %v186
    %s196 = sld [smem:[#allocation2 + $0x4]]
    %v197 = vstv %s196
    %v198 = vmul.f32 %v39, %v197
    %v199 = vmul.f32 %v40, %v197
    %v200 = vmul.f32 %v41, %v197
    %v201 = vmul.f32 %v42, %v197
    %v202 = vmul.f32 %v43, %v197
    %v203 = vmul.f32 %v44, %v197
    %v204 = vmul.f32 %v45, %v197
    %v205 = vmul.f32 %v46, %v197
    %s206 = sld [smem:[#allocation4 + $0x4]]
    %v207 = vstv %s206
    %v208 = vadd.f32 %v198, %v207
    %v209 = vadd.f32 %v199, %v207
    %v210 = vadd.f32 %v200, %v207
    %v211 = vadd.f32 %v201, %v207
    %v212 = vadd.f32 %v202, %v207
    %v213 = vadd.f32 %v203, %v207
    %v214 = vadd.f32 %v204, %v207
    %v215 = vadd.f32 %v205, %v207
    %v216 = vmax.f32 %v208, 0.0
    %v217 = vmax.f32 %v209, 0.0
    %v218 = vmax.f32 %v210, 0.0
    %v219 = vmax.f32 %v211, 0.0
    %v220 = vmax.f32 %v212, 0.0
    %v221 = vmax.f32 %v213, 0.0
    %v222 = vmax.f32 %v214, 0.0
    %v223 = vmax.f32 %v215, 0.0
    %s224 = scalar_lea.vmem %s3, 256
    %225 = vst.msk [vmem:[%s224] sm:$0xff] %vm75, %v216
    %226 = vst.msk [vmem:[%s224 + $0x8] sm:$0xff] %vm75, %v217
    %227 = vst.msk [vmem:[%s224 + $0x10] sm:$0xff] %vm75, %v218
    %228 = vst.msk [vmem:[%s224 + $0x18] sm:$0xff] %vm75, %v219
    %229 = vst.msk [vmem:[%s224 + $0x20] sm:$0xff] %vm75, %v220
    %230 = vst.msk [vmem:[%s224 + $0x28] sm:$0xff] %vm75, %v221
    %231 = vst.msk [vmem:[%s224 + $0x30] sm:$0xff] %vm75, %v222
    %232 = vst.msk [vmem:[%s224 + $0x38] sm:$0xf] %vm83, %v223
    %s233 = sld [smem:[#allocation2 + $0x5]]
    %v234 = vstv %s233
    %v235 = vmul.f32 %v39, %v234
    %v236 = vmul.f32 %v40, %v234
    %v237 = vmul.f32 %v41, %v234
    %v238 = vmul.f32 %v42, %v234
    %v239 = vmul.f32 %v43, %v234
    %v240 = vmul.f32 %v44, %v234
    %v241 = vmul.f32 %v45, %v234
    %v242 = vmul.f32 %v46, %v234
    %s243 = sld [smem:[#allocation4 + $0x5]]
    %v244 = vstv %s243
    %v245 = vadd.f32 %v235, %v244
    %v246 = vadd.f32 %v236, %v244
    %v247 = vadd.f32 %v237, %v244
    %v248 = vadd.f32 %v238, %v244
    %v249 = vadd.f32 %v239, %v244
    %v250 = vadd.f32 %v240, %v244
    %v251 = vadd.f32 %v241, %v244
    %v252 = vadd.f32 %v242, %v244
    %v253 = vmax.f32 %v245, 0.0
    %v254 = vmax.f32 %v246, 0.0
    %v255 = vmax.f32 %v247, 0.0
    %v256 = vmax.f32 %v248, 0.0
    %v257 = vmax.f32 %v249, 0.0
    %v258 = vmax.f32 %v250, 0.0
    %v259 = vmax.f32 %v251, 0.0
    %v260 = vmax.f32 %v252, 0.0
    %s261 = scalar_lea.vmem %s3, 320
    %262 = vst.msk [vmem:[%s261] sm:$0xff] %vm75, %v253
    %263 = vst.msk [vmem:[%s261 + $0x8] sm:$0xff] %vm75, %v254
    %264 = vst.msk [vmem:[%s261 + $0x10] sm:$0xff] %vm75, %v255
    %265 = vst.msk [vmem:[%s261 + $0x18] sm:$0xff] %vm75, %v256
    %266 = vst.msk [vmem:[%s261 + $0x20] sm:$0xff] %vm75, %v257
    %267 = vst.msk [vmem:[%s261 + $0x28] sm:$0xff] %vm75, %v258
    %268 = vst.msk [vmem:[%s261 + $0x30] sm:$0xff] %vm75, %v259
    %269 = vst.msk [vmem:[%s261 + $0x38] sm:$0xf] %vm83, %v260
    %s270 = sld [smem:[#allocation2 + $0x6]]
    %v271 = vstv %s270
    %v272 = vmul.f32 %v39, %v271
    %v273 = vmul.f32 %v40, %v271
    %v274 = vmul.f32 %v41, %v271
    %v275 = vmul.f32 %v42, %v271
    %v276 = vmul.f32 %v43, %v271
    %v277 = vmul.f32 %v44, %v271
    %v278 = vmul.f32 %v45, %v271
    %v279 = vmul.f32 %v46, %v271
    %s280 = sld [smem:[#allocation4 + $0x6]]
    %v281 = vstv %s280
    %v282 = vadd.f32 %v272, %v281
    %v283 = vadd.f32 %v273, %v281
    %v284 = vadd.f32 %v274, %v281
    %v285 = vadd.f32 %v275, %v281
    %v286 = vadd.f32 %v276, %v281
    %v287 = vadd.f32 %v277, %v281
    %v288 = vadd.f32 %v278, %v281
    %v289 = vadd.f32 %v279, %v281
    %v290 = vmax.f32 %v282, 0.0
    %v291 = vmax.f32 %v283, 0.0
    %v292 = vmax.f32 %v284, 0.0
    %v293 = vmax.f32 %v285, 0.0
    %v294 = vmax.f32 %v286, 0.0
    %v295 = vmax.f32 %v287, 0.0
    %v296 = vmax.f32 %v288, 0.0
    %v297 = vmax.f32 %v289, 0.0
    %s298 = scalar_lea.vmem %s3, 384
    %299 = vst.msk [vmem:[%s298] sm:$0xff] %vm75, %v290
    %300 = vst.msk [vmem:[%s298 + $0x8] sm:$0xff] %vm75, %v291
    %301 = vst.msk [vmem:[%s298 + $0x10] sm:$0xff] %vm75, %v292
    %302 = vst.msk [vmem:[%s298 + $0x18] sm:$0xff] %vm75, %v293
    %303 = vst.msk [vmem:[%s298 + $0x20] sm:$0xff] %vm75, %v294
    %304 = vst.msk [vmem:[%s298 + $0x28] sm:$0xff] %vm75, %v295
    %305 = vst.msk [vmem:[%s298 + $0x30] sm:$0xff] %vm75, %v296
    %306 = vst.msk [vmem:[%s298 + $0x38] sm:$0xf] %vm83, %v297
    // Predicated region
    $region22: #{tpu_custom_call.1} parent=1 // pred_check
      _
    $region23: #{tpu_custom_call.1} parent=1 // pred_check_branch
      %308 = sbr.rel (0) target = $region25
    $region24: #{tpu_custom_call.1} parent=1 // pred_region
      _
    $region25: #{tpu_custom_call.1} parent=1 // pred_fallthru
      _
    // Predicated region
    $region26: #{tpu_custom_call.1} parent=1 // pred_check
      _
    $region27: #{tpu_custom_call.1} parent=1 // pred_check_branch
      %310 = sbr.rel (0) target = $region29
    $region28: #{tpu_custom_call.1} parent=1 // pred_region
      _
    $region29: #{tpu_custom_call.1} parent=1 // pred_fallthru
      _
    %311 = vsyncpa [#allocation3], 1
    %312 = vsyncpa [#allocation5], 1

</llo_original>
